<compile_context>
chip_gen: v7x
topology: tpu7x:2x2x1
jax: 0.10.0
libtpu: 0.0.40
codegen_flags: <defaults>
</compile_context>

<pallas_src>
import jax
import jax.numpy as jnp
from jax.experimental import pallas as pl
from jax.experimental.pallas import tpu as pltpu


# -----------------------------------------------------------------------------
# Kernel: full T-step recurrence in one pallas_call
# -----------------------------------------------------------------------------
def simple_model1_seq_kernel(
    x_ref,       # (1, B, 16)   per-step packed input [one_hot(7)|c_prev|c_same|pad]
    hc0_ref,     # (2, B, H)    initial [h0 ; c0] (resident, read at t==0)
    p_ref,       # (R, 4H)      packed params (see pack_params)
    out_ref,     # (B, T_pad)   lane-dense output block (resident accumulator)
    hc_out_ref,  # (2, B, H)    final [h ; c]  (aliased with hc0)
    h_sc,        # (B, H)       VMEM scratch: hidden state
    c_sc,        # (B, H)       VMEM scratch: cell state
):
    t = pl.program_id(0)
    T = pl.num_programs(0)
    B = h_sc.shape[0]
    H = h_sc.shape[1]
    K = 16 + H                      # fused input width  [x(16) | h(H)]

    @pl.when(t == 0)
    def _init():
        h_sc[...] = hc0_ref[0]
        c_sc[...] = hc0_ref[1]
        out_ref[...] = jnp.zeros_like(out_ref)

    # --- one fused MXU pass for both gate projections ------------------------
    xh = jnp.concatenate([x_ref[0], h_sc[...]], axis=1)            # (B, K)
    gates = (
        jnp.dot(xh, p_ref[0:K, :], preferred_element_type=jnp.float32)
        + p_ref[K:K + 1, :]                                          # bias_all
    )                                                                # (B, 4H)

    # --- trimmed nonlinearities: 1 full sigmoid + 1 quarter tanh --------------
    sig = jax.nn.sigmoid(gates)                                      # i, f, -, o
    i_g = sig[:, 0 * H:1 * H]
    f_g = sig[:, 1 * H:2 * H]
    o_g = sig[:, 3 * H:4 * H]
    g_g = jnp.tanh(gates[:, 2 * H:3 * H])                            # g only

    c_new = f_g * c_sc[...] + i_g * g_g
    h_new = o_g * jnp.tanh(c_new)
    h_sc[...] = h_new
    c_sc[...] = c_new

    # --- output head: Linear(H -> 1) on sigmoid(h_new) ------------------------
    sig_h = jax.nn.sigmoid(h_new)
    w_fc = p_ref[K + 1:K + 2, 0:H]                                   # (1, H)
    b_fc = p_ref[K + 2:K + 3, 0:1]                                   # (1, 1)
    head = jnp.sum(sig_h * w_fc, axis=1, keepdims=True) + b_fc       # (B, 1)

    # Scatter this step's scalar into lane column t of the resident output
    # block (iota/select instead of a dynamic masked lane store).
    col = jax.lax.broadcasted_iota(jnp.int32, out_ref.shape, 1)
    out_ref[...] = jnp.where(col == t, head, out_ref[...])

    @pl.when(t == T - 1)
    def _finalize():
        hc_out_ref[0] = h_sc[...]
        hc_out_ref[1] = c_sc[...]


# -----------------------------------------------------------------------------
# Host-side packing helpers
# -----------------------------------------------------------------------------
def pack_params(params, H):
    """Fold the station embedding into the gate projection and pack everything
    into one (R, 4H) f32 slab (K = 16 + H):
        rows [0:16)   : W_x  (input->gates; rows 0..6 = w_emb_j * w_ih_t[0],
                        row 7 = w_ih_t[1] (c_prev), row 8 = w_ih_t[2] (c_same),
                        rows 9..15 zero pad)
        rows [16:K)   : W_hh (hidden->gates)
        row  K        : bias_all = b_ih + b_hh + b_emb * w_ih_t[0]
        row  K+1      : w_fc (first H lanes)
        row  K+2      : b_fc (lane 0)
    """
    w_emb, b_emb = params["w_emb"], params["b_emb"]        # (1,7), (1,1)
    w_ih_t, w_hh_t = params["w_ih_t"], params["w_hh_t"]    # (3,4H), (H,4H)
    b_ih, b_hh = params["b_ih"], params["b_hh"]            # (1,4H), (1,4H)
    w_fc, b_fc = params["w_fc"], params["b_fc"]            # (1,H), (1,1)

    G = 4 * H
    K = 16 + H
    R = ((K + 3 + 7) // 8) * 8

    packed = jnp.zeros((R, G), jnp.float32)
    packed = packed.at[0:7, :].set(w_emb[0, :, None] * w_ih_t[0:1, :])
    packed = packed.at[7, :].set(w_ih_t[1, :])
    packed = packed.at[8, :].set(w_ih_t[2, :])
    packed = packed.at[16:16 + H, :].set(w_hh_t)
    bias_all = b_ih + b_hh + b_emb[0, 0] * w_ih_t[0:1, :]
    packed = packed.at[K, :].set(bias_all[0])
    packed = packed.at[K + 1, 0:H].set(w_fc[0])
    packed = packed.at[K + 2, 0].set(b_fc[0, 0])
    return packed


def pack_inputs(one_hot_seq, c_prev_seq, c_same_seq):
    """Pack the per-step activation inputs into one lane-contiguous
    (T, B, 16) slab: [one_hot(7) | c_prev | c_same | zero-pad(7)]."""
    T, B, _ = one_hot_seq.shape
    pad = jnp.zeros((T, B, 7), jnp.float32)
    return jnp.concatenate([one_hot_seq, c_prev_seq, c_same_seq, pad], axis=2)


# -----------------------------------------------------------------------------
# Forward wrapper (whole sequence in one kernel launch)
# -----------------------------------------------------------------------------
def simple_model1_forward_seq(x_seq, hc0, packed):
    T, B, _ = x_seq.shape
    H = hc0.shape[2]
    R, G = packed.shape
    T_pad = max(128, ((T + 127) // 128) * 128)     # lane-dense output block

    cost = pl.CostEstimate(
        flops=T * (2 * B * (16 + H) * G + 12 * B * G + 4 * B * H),
        transcendentals=T * (7 * B * H),           # sig(4H) + tanh(H) + tanh(H) + sig(H)
        bytes_accessed=4 * (T * B * 16 + 2 * 2 * B * H + R * G + B * T_pad),
    )

    out, hc_new = pl.pallas_call(
        simple_model1_seq_kernel,
        out_shape=(
            jax.ShapeDtypeStruct((B, T_pad), jnp.float32),
            jax.ShapeDtypeStruct((2, B, H), jnp.float32),
        ),
        grid=(T,),
        in_specs=[
            pl.BlockSpec((1, B, 16), lambda t: (t, 0, 0)),    # streamed per step
            pl.BlockSpec((2, B, H), lambda t: (0, 0, 0)),     # resident
            pl.BlockSpec((R, G), lambda t: (0, 0)),           # resident weights
        ],
        out_specs=(
            pl.BlockSpec((B, T_pad), lambda t: (0, 0)),       # resident accumulator
            pl.BlockSpec((2, B, H), lambda t: (0, 0, 0)),     # written at t==T-1
        ),
        scratch_shapes=[
            pltpu.VMEM((B, H), jnp.float32),                  # h state
            pltpu.VMEM((B, H), jnp.float32),                  # c state
        ],
        input_output_aliases={1: 1},                          # reuse h/c buffer
        compiler_params=pltpu.CompilerParams(
            dimension_semantics=("arbitrary",)),
        cost_estimate=cost,
    )(x_seq, hc0, packed)
    return out, hc_new


# -----------------------------------------------------------------------------
# Pure-JAX reference (raw, unfolded parameters, step-by-step recurrence)
# -----------------------------------------------------------------------------
def reference_forward_seq(one_hot_seq, c_prev_seq, c_same_seq, params, h0, c0):
    T = one_hot_seq.shape[0]
    H = h0.shape[1]
    h, c = h0, c0
    outs = []
    for t in range(T):
        emb = one_hot_seq[t] @ params["w_emb"].T + params["b_emb"]     # (B,1)
        x = jnp.concatenate([emb, c_prev_seq[t], c_same_seq[t]], axis=1)
        gates = (x @ params["w_ih_t"] + h @ params["w_hh_t"]
                 + params["b_ih"] + params["b_hh"])
        i_g = jax.nn.sigmoid(gates[:, 0 * H:1 * H])
        f_g = jax.nn.sigmoid(gates[:, 1 * H:2 * H])
        g_g = jnp.tanh(gates[:, 2 * H:3 * H])
        o_g = jax.nn.sigmoid(gates[:, 3 * H:4 * H])
        c = f_g * c + i_g * g_g
        h = o_g * jnp.tanh(c)
        outs.append(jax.nn.sigmoid(h) @ params["w_fc"].T + params["b_fc"])
    return jnp.concatenate(outs, axis=1), h, c                         # (B,T)


def init_params(key, hidden_size):
    """Deterministic synthetic parameters (shapes per the module's __init__)."""
    ks = jax.random.split(key, 8)
    H = hidden_size
    u = lambda k, shape, s: jax.random.uniform(k, shape, jnp.float32, -s, s)
    return {
        # nn.Linear(7, 1)
        "w_emb": u(ks[0], (1, 7), 7 ** -0.5),
        "b_emb": u(ks[1], (1, 1), 7 ** -0.5),
        # nn.LSTMCell(3, H)  (stored pre-transposed for x @ W)
        "w_ih_t": u(ks[2], (3, 4 * H), H ** -0.5),
        "w_hh_t": u(ks[3], (H, 4 * H), H ** -0.5),
        "b_ih": u(ks[4], (1, 4 * H), H ** -0.5),
        "b_hh": u(ks[5], (1, 4 * H), H ** -0.5),
        # nn.Linear(H, 1)
        "w_fc": u(ks[6], (1, H), H ** -0.5),
        "b_fc": u(ks[7], (1, 1), H ** -0.5),
    }


if __name__ == "__main__":
    hidden_size = 32
    batch_size = 8          # multiple of 8 (f32 sublanes)
    seq_len = 8             # recurrent steps internalized in the kernel

    key = jax.random.PRNGKey(0)
    k_params, k_id, k_prev, k_same = jax.random.split(key, 4)

    params = init_params(k_params, hidden_size)

    ids = jax.random.randint(k_id, (seq_len, batch_size), 0, 7)
    one_hot_seq = jax.nn.one_hot(ids, 7, dtype=jnp.float32)            # (T,B,7)
    c_prev_seq = jax.random.normal(k_prev, (seq_len, batch_size, 1), jnp.float32)
    c_same_seq = jax.random.normal(k_same, (seq_len, batch_size, 1), jnp.float32)

    # init_state(): zero h_0 / c_0
    h0 = jnp.zeros((batch_size, hidden_size), jnp.float32)
    c0 = jnp.zeros((batch_size, hidden_size), jnp.float32)

    # Host-side packing (once per model / per sequence, not per step).
    packed = pack_params(params, hidden_size)
    x_seq = pack_inputs(one_hot_seq, c_prev_seq, c_same_seq)           # (T,B,16)
    hc0 = jnp.stack([h0, c0], axis=0)                                  # (2,B,H)

    out_full, hc_new = simple_model1_forward_seq(x_seq, hc0, packed)
    jax.block_until_ready((out_full, hc_new))

    out = out_full[:, :seq_len]                                        # (B,T)
    out_ref, h_ref, c_ref = reference_forward_seq(
        one_hot_seq, c_prev_seq, c_same_seq, params, h0, c0)

    assert jnp.allclose(out, out_ref, atol=1e-4), "output mismatch"
    assert jnp.allclose(hc_new[0], h_ref, atol=1e-4), "h state mismatch"
    assert jnp.allclose(hc_new[1], c_ref, atol=1e-4), "c state mismatch"

    print("KERNEL_OK")
</pallas_src>

<mosaic_0001>
module attributes {stable_mosaic.version = 11 : i64} {
  func.func @simple_model1_seq_kernel(%arg0: i32, %arg1: memref<1x8x16xf32, #tpu.memory_space<vmem>>, %arg2: memref<2x8x32xf32, #tpu.memory_space<vmem>>, %arg3: memref<56x128xf32, #tpu.memory_space<vmem>>, %arg4: memref<8x128xf32, #tpu.memory_space<vmem>>, %arg5: memref<2x8x32xf32, #tpu.memory_space<vmem>>, %arg6: memref<8x32xf32, #tpu.memory_space<vmem>>, %arg7: memref<8x32xf32, #tpu.memory_space<vmem>>) attributes {dimension_semantics = [#tpu.dimension_semantics<arbitrary>], iteration_bounds = array<i64: 8>, scalar_prefetch = 0 : i64, scratch_operands = 2 : i64, tpu.core_type = #tpu.core_type<tc>, window_params = [{transform_indices = @transform_0, window_bounds = array<i64: 1, 8, 16>}, {pipeline_mode = #tpu.pipeline_mode<synchronous>, transform_indices = @transform_1, window_bounds = array<i64: 2, 8, 32>}, {pipeline_mode = #tpu.pipeline_mode<synchronous>, transform_indices = @transform_2, window_bounds = array<i64: 56, 128>}, {pipeline_mode = #tpu.pipeline_mode<synchronous>, transform_indices = @transform_3, window_bounds = array<i64: 8, 128>}, {pipeline_mode = #tpu.pipeline_mode<synchronous>, transform_indices = @transform_4, window_bounds = array<i64: 2, 8, 32>}]} {
    %c0_i32 = arith.constant 0 : i32
    %0 = arith.cmpi eq, %arg0, %c0_i32 : i32
    %1 = arith.extui %0 : i1 to i32
    %c0_i32_0 = arith.constant 0 : i32
    %2 = arith.cmpi ne, %1, %c0_i32_0 : i32
    scf.if %2 {
      %c0_24 = arith.constant 0 : index
      %c0_25 = arith.constant 0 : index
      %c0_26 = arith.constant 0 : index
      %54 = vector.load %arg2[%c0_24, %c0_25, %c0_26] : memref<2x8x32xf32, #tpu.memory_space<vmem>>, vector<1x8x32xf32>
      %55 = vector.shape_cast %54 : vector<1x8x32xf32> to vector<8x32xf32>
      %c0_27 = arith.constant 0 : index
      %c0_28 = arith.constant 0 : index
      %56 = vector.load %arg6[%c0_27, %c0_28] : memref<8x32xf32, #tpu.memory_space<vmem>>, vector<8x32xf32>
      tpu.vector_store %arg6[%c0_27, %c0_28], %55 {strides = array<i32>} : memref<8x32xf32, #tpu.memory_space<vmem>>, vector<8x32xf32>,
      %c1 = arith.constant 1 : index
      %c0_29 = arith.constant 0 : index
      %c0_30 = arith.constant 0 : index
      %57 = vector.load %arg2[%c1, %c0_29, %c0_30] : memref<2x8x32xf32, #tpu.memory_space<vmem>>, vector<1x8x32xf32>
      %58 = vector.shape_cast %57 : vector<1x8x32xf32> to vector<8x32xf32>
      %c0_31 = arith.constant 0 : index
      %c0_32 = arith.constant 0 : index
      %59 = vector.load %arg7[%c0_31, %c0_32] : memref<8x32xf32, #tpu.memory_space<vmem>>, vector<8x32xf32>
      tpu.vector_store %arg7[%c0_31, %c0_32], %58 {strides = array<i32>} : memref<8x32xf32, #tpu.memory_space<vmem>>, vector<8x32xf32>,
      %cst_33 = arith.constant 0.000000e+00 : f32
      %60 = vector.broadcast %cst_33 : f32 to vector<8x128xf32>
      %c0_34 = arith.constant 0 : index
      %c0_35 = arith.constant 0 : index
      %61 = vector.load %arg4[%c0_34, %c0_35] : memref<8x128xf32, #tpu.memory_space<vmem>>, vector<8x128xf32>
      tpu.vector_store %arg4[%c0_34, %c0_35], %60 {strides = array<i32>} : memref<8x128xf32, #tpu.memory_space<vmem>>, vector<8x128xf32>,
    } else {
    }
    %c0 = arith.constant 0 : index
    %c0_1 = arith.constant 0 : index
    %c0_2 = arith.constant 0 : index
    %3 = vector.load %arg1[%c0, %c0_1, %c0_2] : memref<1x8x16xf32, #tpu.memory_space<vmem>>, vector<1x8x16xf32>
    %4 = vector.shape_cast %3 : vector<1x8x16xf32> to vector<8x16xf32>
    %c0_3 = arith.constant 0 : index
    %c0_4 = arith.constant 0 : index
    %5 = vector.load %arg6[%c0_3, %c0_4] : memref<8x32xf32, #tpu.memory_space<vmem>>, vector<8x32xf32>
    %6 = tpu.concatenate %4, %5 in 1 : vector<8x16xf32>, vector<8x32xf32> -> vector<8x48xf32>
    %c0_5 = arith.constant 0 : index
    %c0_6 = arith.constant 0 : index
    %7 = vector.load %arg3[%c0_5, %c0_6] : memref<56x128xf32, #tpu.memory_space<vmem>>, vector<48x128xf32>
    %cst = arith.constant dense<0.000000e+00> : vector<8x128xf32>
    %8 = tpu.matmul %6, %7, %cst {dimension_numbers = #tpu.dot_dimension_numbers<[1], [0], [0], [1], [0, 0, 1, 1], [], []>} : vector<8x48xf32>, vector<48x128xf32>, vector<8x128xf32> -> vector<8x128xf32>
    %c48 = arith.constant 48 : index
    %c0_7 = arith.constant 0 : index
    %9 = vector.load %arg3[%c48, %c0_7] : memref<56x128xf32, #tpu.memory_space<vmem>>, vector<1x128xf32>
    %10 = vector.broadcast %9 : vector<1x128xf32> to vector<8x128xf32>
    %11 = arith.addf %8, %10 : vector<8x128xf32>
    %12 = arith.negf %11 : vector<8x128xf32>
    %13 = math.exp %12 : vector<8x128xf32>
    %cst_8 = arith.constant 1.000000e+00 : f32
    %14 = vector.broadcast %cst_8 : f32 to vector<8x128xf32>
    %15 = arith.addf %14, %13 : vector<8x128xf32>
    %16 = arith.divf %14, %15 : vector<8x128xf32>
    %17 = vector.extract_strided_slice %16 {offsets = [0, 0], sizes = [8, 32], strides = [1, 1]} : vector<8x128xf32> to vector<8x32xf32>
    %18 = vector.extract_strided_slice %16 {offsets = [0, 32], sizes = [8, 32], strides = [1, 1]} : vector<8x128xf32> to vector<8x32xf32>
    %19 = vector.extract_strided_slice %16 {offsets = [0, 96], sizes = [8, 32], strides = [1, 1]} : vector<8x128xf32> to vector<8x32xf32>
    %20 = vector.extract_strided_slice %11 {offsets = [0, 64], sizes = [8, 32], strides = [1, 1]} : vector<8x128xf32> to vector<8x32xf32>
    %21 = math.tanh %20 : vector<8x32xf32>
    %c0_9 = arith.constant 0 : index
    %c0_10 = arith.constant 0 : index
    %22 = vector.load %arg7[%c0_9, %c0_10] : memref<8x32xf32, #tpu.memory_space<vmem>>, vector<8x32xf32>
    %23 = arith.mulf %18, %22 : vector<8x32xf32>
    %24 = arith.mulf %17, %21 : vector<8x32xf32>
    %25 = arith.addf %23, %24 : vector<8x32xf32>
    %26 = math.tanh %25 : vector<8x32xf32>
    %27 = arith.mulf %19, %26 : vector<8x32xf32>
    %c0_11 = arith.constant 0 : index
    %c0_12 = arith.constant 0 : index
    %28 = vector.load %arg6[%c0_11, %c0_12] : memref<8x32xf32, #tpu.memory_space<vmem>>, vector<8x32xf32>
    tpu.vector_store %arg6[%c0_11, %c0_12], %27 {strides = array<i32>} : memref<8x32xf32, #tpu.memory_space<vmem>>, vector<8x32xf32>,
    %c0_13 = arith.constant 0 : index
    %c0_14 = arith.constant 0 : index
    %29 = vector.load %arg7[%c0_13, %c0_14] : memref<8x32xf32, #tpu.memory_space<vmem>>, vector<8x32xf32>
    tpu.vector_store %arg7[%c0_13, %c0_14], %25 {strides = array<i32>} : memref<8x32xf32, #tpu.memory_space<vmem>>, vector<8x32xf32>,
    %30 = arith.negf %27 : vector<8x32xf32>
    %31 = math.exp %30 : vector<8x32xf32>
    %cst_15 = arith.constant 1.000000e+00 : f32
    %32 = vector.broadcast %cst_15 : f32 to vector<8x32xf32>
    %33 = arith.addf %32, %31 : vector<8x32xf32>
    %34 = arith.divf %32, %33 : vector<8x32xf32>
    %c49 = arith.constant 49 : index
    %c0_16 = arith.constant 0 : index
    %35 = vector.load %arg3[%c49, %c0_16] : memref<56x128xf32, #tpu.memory_space<vmem>>, vector<1x32xf32>
    %c50 = arith.constant 50 : index
    %c0_17 = arith.constant 0 : index
    %36 = vector.load %arg3[%c50, %c0_17] : memref<56x128xf32, #tpu.memory_space<vmem>>, vector<1x1xf32>
    %37 = vector.broadcast %35 : vector<1x32xf32> to vector<8x32xf32>
    %38 = arith.mulf %34, %37 : vector<8x32xf32>
    %cst_18 = arith.constant dense<0.000000e+00> : vector<8xf32>
    %39 = vector.multi_reduction <add>, %38, %cst_18 [1] : vector<8x32xf32> to vector<8xf32>
    %40 = vector.shape_cast %39 : vector<8xf32> to vector<8x1xf32>
    %41 = vector.broadcast %36 : vector<1x1xf32> to vector<8x1xf32>
    %42 = arith.addf %40, %41 : vector<8x1xf32>
    %43 = tpu.iota {dimensions = array<i32: 1>} : vector<8x128xi32>
    %44 = vector.broadcast %arg0 : i32 to vector<8x128xi32>
    %45 = arith.cmpi eq, %43, %44 : vector<8x128xi32>
    %c0_19 = arith.constant 0 : index
    %c0_20 = arith.constant 0 : index
    %46 = vector.load %arg4[%c0_19, %c0_20] : memref<8x128xf32, #tpu.memory_space<vmem>>, vector<8x128xf32>
    %47 = vector.shape_cast %42 : vector<8x1xf32> to vector<8x1xf32>
    %48 = vector.broadcast %47 : vector<8x1xf32> to vector<8x128xf32>
    %49 = arith.select %45, %48, %46 : vector<8x128xi1>, vector<8x128xf32>
    %c0_21 = arith.constant 0 : index
    %c0_22 = arith.constant 0 : index
    %50 = vector.load %arg4[%c0_21, %c0_22] : memref<8x128xf32, #tpu.memory_space<vmem>>, vector<8x128xf32>
    tpu.vector_store %arg4[%c0_21, %c0_22], %49 {strides = array<i32>} : memref<8x128xf32, #tpu.memory_space<vmem>>, vector<8x128xf32>,
    %c7_i32 = arith.constant 7 : i32
    %51 = arith.cmpi eq, %arg0, %c7_i32 : i32
    %52 = arith.extui %51 : i1 to i32
    %c0_i32_23 = arith.constant 0 : i32
    %53 = arith.cmpi ne, %52, %c0_i32_23 : i32
    scf.if %53 {
      %c0_24 = arith.constant 0 : index
      %c0_25 = arith.constant 0 : index
      %54 = vector.load %arg6[%c0_24, %c0_25] : memref<8x32xf32, #tpu.memory_space<vmem>>, vector<8x32xf32>
      %c0_26 = arith.constant 0 : index
      %c0_27 = arith.constant 0 : index
      %c0_28 = arith.constant 0 : index
      %55 = vector.load %arg5[%c0_26, %c0_27, %c0_28] : memref<2x8x32xf32, #tpu.memory_space<vmem>>, vector<1x8x32xf32>
      %56 = vector.shape_cast %55 : vector<1x8x32xf32> to vector<8x32xf32>
      %57 = vector.shape_cast %54 : vector<8x32xf32> to vector<1x8x32xf32>
      tpu.vector_store %arg5[%c0_26, %c0_27, %c0_28], %57 {strides = array<i32>} : memref<2x8x32xf32, #tpu.memory_space<vmem>>, vector<1x8x32xf32>,
      %c0_29 = arith.constant 0 : index
      %c0_30 = arith.constant 0 : index
      %58 = vector.load %arg7[%c0_29, %c0_30] : memref<8x32xf32, #tpu.memory_space<vmem>>, vector<8x32xf32>
      %c1 = arith.constant 1 : index
      %c0_31 = arith.constant 0 : index
      %c0_32 = arith.constant 0 : index
      %59 = vector.load %arg5[%c1, %c0_31, %c0_32] : memref<2x8x32xf32, #tpu.memory_space<vmem>>, vector<1x8x32xf32>
      %60 = vector.shape_cast %59 : vector<1x8x32xf32> to vector<8x32xf32>
      %61 = vector.shape_cast %58 : vector<8x32xf32> to vector<1x8x32xf32>
      tpu.vector_store %arg5[%c1, %c0_31, %c0_32], %61 {strides = array<i32>} : memref<2x8x32xf32, #tpu.memory_space<vmem>>, vector<1x8x32xf32>,
    } else {
    }
    return
  }
  func.func @transform_0(%arg0: i32) -> (i32, i32, i32) {
    %c0_i32 = arith.constant 0 : i32
    %c0_i32_0 = arith.constant 0 : i32
    %c0_i32_1 = arith.constant 0 : i32
    return %arg0, %c0_i32, %c0_i32_0 : i32, i32, i32
  }
  func.func @transform_1(%arg0: i32) -> (i32, i32, i32) {
    %c0_i32 = arith.constant 0 : i32
    %c0_i32_0 = arith.constant 0 : i32
    %c0_i32_1 = arith.constant 0 : i32
    %c0_i32_2 = arith.constant 0 : i32
    return %c0_i32, %c0_i32_0, %c0_i32_1 : i32, i32, i32
  }
  func.func @transform_2(%arg0: i32) -> (i32, i32) {
    %c0_i32 = arith.constant 0 : i32
    %c0_i32_0 = arith.constant 0 : i32
    %c0_i32_1 = arith.constant 0 : i32
    return %c0_i32, %c0_i32_0 : i32, i32
  }
  func.func @transform_3(%arg0: i32) -> (i32, i32) {
    %c0_i32 = arith.constant 0 : i32
    %c0_i32_0 = arith.constant 0 : i32
    %c0_i32_1 = arith.constant 0 : i32
    return %c0_i32, %c0_i32_0 : i32, i32
  }
  func.func @transform_4(%arg0: i32) -> (i32, i32, i32) {
    %c0_i32 = arith.constant 0 : i32
    %c0_i32_0 = arith.constant 0 : i32
    %c0_i32_1 = arith.constant 0 : i32
    %c0_i32_2 = arith.constant 0 : i32
    return %c0_i32, %c0_i32_0, %c0_i32_1 : i32, i32, i32
  }
}

</mosaic_0001>

<llo_original>
// kernel: tpu_custom_call.1
$region0: #{tpu_custom_call.1}
  #allocation0 [shape = 'u32[]', space=smem, size = 0x4, offset = 0x4, fixed_abs, tag = 'smem constant byte address 0x4 - core index']
  #allocation1 [shape = 'u32[144,128]{1,0:T(1,128)}', space=vmem, size = 0x12000, scoped, tag = 'internal scratch']
  #allocation2 [shape = 'f32[8,32]{1,0:T(8,128)}', space=vmem, size = 0x1000, scoped, tag = 'scratch operand']
  #allocation3 [shape = 'f32[8,32]{1,0:T(8,128)}', space=vmem, size = 0x1000, scoped, tag = 'scratch operand']
  %s0 = inlined_call_operand.hbm [shape: f32[8,8,16], index: 0, kind: input, shape index: {}]
  %s1 = inlined_call_operand.hbm [shape: f32[2,8,32], index: 1, kind: input, shape index: {}, may-alias: {1,4}]
  %s2 = inlined_call_operand.hbm [shape: f32[56,128], index: 2, kind: input, shape index: {}]
  %s3 = inlined_call_operand.hbm [shape: f32[8,128], index: 3, kind: output, shape index: {0}]
  %s4 = inlined_call_operand.hbm [shape: f32[2,8,32], index: 4, kind: output, shape index: {1}, may-alias: {1,4}]
  %5 = xla_tuple %s3, %s4
  %s6 = sld [smem:[#allocation0]]
  $region73: #{tpu_custom_call.1} parent=0
    _
  %s8 = ssub.s32 1, %s6
  %s9 = scalar_select 0, %s8, %s6
  $region1: #{tpu_custom_call.1} parent=0
    #allocation4 [shape = 'u8[8192]{0}', space=vmem, size = 0x2000, scoped, tag = 'input window, operand 0']
    #allocation5 [shape = 's32[2]{0}', space=sflag, size = 0x8, scoped, tag = 'scoped memory for tpu_custom_call.1']
    #allocation6 [shape = 's32[2]{0}', space=sflag, size = 0x8, scoped, tag = 'scoped memory for tpu_custom_call.1']
    #allocation7 [shape = 'u8[8192]{0}', space=vmem, size = 0x2000, scoped, tag = 'input window, operand 1, single buffered']
    #allocation8 [shape = 's32[1]{0}', space=sflag, size = 0x4, scoped, tag = 'scoped memory for tpu_custom_call.1']
    #allocation9 [shape = 'u8[28672]{0}', space=vmem, size = 0x7000, scoped, tag = 'input window, operand 2, single buffered']
    #allocation10 [shape = 'u8[4096]{0}', space=vmem, size = 0x1000, scoped, tag = 'output window, operand 0, single buffered']
    #allocation11 [shape = 'u8[8192]{0}', space=vmem, size = 0x2000, scoped, tag = 'output window, operand 1, single buffered']
    #allocation12 [shape = 's32[1]{0}', space=sflag, size = 0x4, scoped, tag = 'scoped memory for tpu_custom_call.1']
    %10 = vsyncpa [#allocation5], 0
    %s11 = scalar_lea.sflag [#allocation5], 1
    %12 = vsyncpa %s11, 0
    %13 = vsyncpa [#allocation8], 0
    %14 = vsyncpa [#allocation6], 0
    %15 = vsyncpa [#allocation12], 0
    loop: start=0, step=1, limit=10
    $region2: #{tpu_custom_call.1} parent=1 // loop_pre_header
      _
    $region3: #{tpu_custom_call.1} parent=1 // loop_header
      %s17 = sphi 0, %s21
      %p18 = scmp.ge.s32.totalorder %s17, 10
      %s27 = sphi 0, %s29
      %s30 = sphi 0, %s27
      %s31 = sphi 0, %s30
      %s47 = sphi 0, %s31
      %s51 = sphi 0, %s51
      %s53 = sphi 0, %s51
      %s54 = sphi 0, %s53
      %s68 = sphi 0, %s54
      %s72 = sphi 0, %s72
      %s74 = sphi 0, %s72
      %s75 = sphi 0, %s74
      %s89 = sphi 0, %s75
      %s93 = sphi 0, %s93
      %s95 = sphi 0, %s93
      %s96 = sphi 0, %s95
      %s110 = sphi 0, %s96
      %s114 = sphi 0, %s114
      %s116 = sphi 0, %s114
      %s117 = sphi 0, %s116
      %s131 = sphi 0, %s117
    $region4: #{tpu_custom_call.1} parent=1 // loop_header_branch
      %20 = sbr.rel (%p18) target = $region8
    $region5: #{tpu_custom_call.1} parent=1 // loop_body
      %s22 = ssub.s32 %s17, 1
      %s23 = ssub.s32 %s17, 2
      %s24 = sadd.s32 %s17, 1
      %s25 = ssub.s32 %s17, %s24
      %p26 = scmp.eq.s32.totalorder %s25, 0
      %s28 = sadd.s32 %s27, 1
      %s29 = scalar_select %p26, %s27, %s28
      %p32 = pneg %p26
      %p33 = scmp.eq.s32.totalorder %s17, 7
      %p34 = por %p32, %p33
      %p35 = scmp.ne.s32.totalorder %s27, %s30
      %p36 = scmp.eq.s32.totalorder %s17, 0
      %p37 = por %p35, %p36
      %p38 = scmp.ne.s32.totalorder %s27, %s30
      %p39 = scmp.eq.s32.totalorder %s22, 7
      %p40 = por %p38, %p39
      %p41 = scmp.ne.s32.totalorder %s30, %s31
      %p42 = scmp.eq.s32.totalorder %s22, 0
      %p43 = por %p41, %p42
      %p44 = scmp.ne.s32.totalorder %s30, %s31
      %p45 = scmp.eq.s32.totalorder %s23, 7
      %p46 = por %p44, %p45
      %p48 = scmp.ne.s32.totalorder %s31, %s47
      %p49 = scmp.eq.s32.totalorder %s23, 0
      %p50 = por %p48, %p49
      %s52 = sadd.s32 %s51, 1
      %p55 = scmp.eq.s32.totalorder %s17, 7
      %p56 = scmp.ne.s32.totalorder %s51, %s53
      %p57 = scmp.eq.s32.totalorder %s17, 0
      %p58 = por %p56, %p57
      %p59 = scmp.ne.s32.totalorder %s51, %s53
      %p60 = scmp.eq.s32.totalorder %s22, 7
      %p61 = por %p59, %p60
      %p62 = scmp.ne.s32.totalorder %s53, %s54
      %p63 = scmp.eq.s32.totalorder %s22, 0
      %p64 = por %p62, %p63
      %p65 = scmp.ne.s32.totalorder %s53, %s54
      %p66 = scmp.eq.s32.totalorder %s23, 7
      %p67 = por %p65, %p66
      %p69 = scmp.ne.s32.totalorder %s54, %s68
      %p70 = scmp.eq.s32.totalorder %s23, 0
      %p71 = por %p69, %p70
      %s73 = sadd.s32 %s72, 1
      %p76 = scmp.eq.s32.totalorder %s17, 7
      %p77 = scmp.ne.s32.totalorder %s72, %s74
      %p78 = scmp.eq.s32.totalorder %s17, 0
      %p79 = por %p77, %p78
      %p80 = scmp.ne.s32.totalorder %s72, %s74
      %p81 = scmp.eq.s32.totalorder %s22, 7
      %p82 = por %p80, %p81
      %p83 = scmp.ne.s32.totalorder %s74, %s75
      %p84 = scmp.eq.s32.totalorder %s22, 0
      %p85 = por %p83, %p84
      %p86 = scmp.ne.s32.totalorder %s74, %s75
      %p87 = scmp.eq.s32.totalorder %s23, 7
      %p88 = por %p86, %p87
      %p90 = scmp.ne.s32.totalorder %s75, %s89
      %p91 = scmp.eq.s32.totalorder %s23, 0
      %p92 = por %p90, %p91
      %s94 = sadd.s32 %s93, 1
      %p97 = scmp.eq.s32.totalorder %s17, 7
      %p98 = scmp.ne.s32.totalorder %s93, %s95
      %p99 = scmp.eq.s32.totalorder %s17, 0
      %p100 = por %p98, %p99
      %p101 = scmp.ne.s32.totalorder %s93, %s95
      %p102 = scmp.eq.s32.totalorder %s22, 7
      %p103 = por %p101, %p102
      %p104 = scmp.ne.s32.totalorder %s95, %s96
      %p105 = scmp.eq.s32.totalorder %s22, 0
      %p106 = por %p104, %p105
      %p107 = scmp.ne.s32.totalorder %s95, %s96
      %p108 = scmp.eq.s32.totalorder %s23, 7
      %p109 = por %p107, %p108
      %p111 = scmp.ne.s32.totalorder %s96, %s110
      %p112 = scmp.eq.s32.totalorder %s23, 0
      %p113 = por %p111, %p112
      %s115 = sadd.s32 %s114, 1
      %p118 = scmp.eq.s32.totalorder %s17, 7
      %p119 = scmp.ne.s32.totalorder %s114, %s116
      %p120 = scmp.eq.s32.totalorder %s17, 0
      %p121 = por %p119, %p120
      %p122 = scmp.ne.s32.totalorder %s114, %s116
      %p123 = scmp.eq.s32.totalorder %s22, 7
      %p124 = por %p122, %p123
      %p125 = scmp.ne.s32.totalorder %s116, %s117
      %p126 = scmp.eq.s32.totalorder %s22, 0
      %p127 = por %p125, %p126
      %p128 = scmp.ne.s32.totalorder %s116, %s117
      %p129 = scmp.eq.s32.totalorder %s23, 7
      %p130 = por %p128, %p129
      %p132 = scmp.ne.s32.totalorder %s117, %s131
      %p133 = scmp.eq.s32.totalorder %s23, 0
      %p134 = por %p132, %p133
      %p135 = scmp.le.s32.totalorder 1, %s17
      %p136 = scmp.lt.s32.totalorder %s17, 9
      %p137 = pnand %p135, %p136
      %p138 = pneg %p137
      // Predicated region
      $region9: #{tpu_custom_call.1} parent=5 // pred_check
        _
      $region10: #{tpu_custom_call.1} parent=5 // pred_check_branch
        %140 = sbr.rel (%p137) target = $region12
      $region11: #{tpu_custom_call.1} parent=5 // pred_region
        %s141 = ssub.s32 %s17, 1
        // Predicated region
        $region13: #{tpu_custom_call.1} parent=11 // pred_check
          %p142 = pneg %p64
        $region14: #{tpu_custom_call.1} parent=11 // pred_check_branch
          %144 = sbr.rel (%p142) target = $region16
        $region15: #{tpu_custom_call.1} parent=11 // pred_region
          %s146 = ssub.s32 256, 256
          %147 = vsyncadd [#allocation8], %s146
          %s148 = sshll.u32 [#allocation7], 4
          %s149 = int_to_ptr.vmem [resolvable:$true] %s148
          %154 = dma.hbm_to_vmem [thread:$0]  %s1, 256, %s149, [#allocation8], 128, 128, 8
        $region16: #{tpu_custom_call.1} parent=11 // pred_fallthru
          _
        // Predicated region
        $region17: #{tpu_custom_call.1} parent=11 // pred_check
          %p155 = pneg %p85
        $region18: #{tpu_custom_call.1} parent=11 // pred_check_branch
          %157 = sbr.rel (%p155) target = $region20
        $region19: #{tpu_custom_call.1} parent=11 // pred_region
          %s159 = ssub.s32 896, 896
          %160 = vsyncadd [#allocation8], %s159
          %s161 = sshll.u32 [#allocation9], 4
          %s162 = int_to_ptr.vmem [resolvable:$true] %s161
          %167 = dma.hbm_to_vmem [thread:$0]  %s2, 896, %s162, [#allocation8], 128, 128, 8
        $region20: #{tpu_custom_call.1} parent=11 // pred_fallthru
          _
      $region12: #{tpu_custom_call.1} parent=5 // pred_fallthru
        _
      %p168 = scmp.lt.s32.totalorder %s17, 8
      // Predicated region
      $region21: #{tpu_custom_call.1} parent=5 // pred_check
        %p169 = pneg %p168
      $region22: #{tpu_custom_call.1} parent=5 // pred_check_branch
        %171 = sbr.rel (%p169) target = $region24
      $region23: #{tpu_custom_call.1} parent=5 // pred_region
        // Predicated region
        $region25: #{tpu_custom_call.1} parent=23 // pred_check
          %p172 = pneg %p37
        $region26: #{tpu_custom_call.1} parent=23 // pred_check_branch
          %174 = sbr.rel (%p172) target = $region28
        $region27: #{tpu_custom_call.1} parent=23 // pred_region
          %s175 = sand.u32 %s27, 1
          %s176 = scalar_lea.sflag [#allocation5], %s175
          %s177 = sand.u32 %s27, 1
          %s178 = smul.addr %s177, 8
          %s179 = scalar_lea.vmem [#allocation4], %s178
          %s181 = ssub.s32 128, 128
          %182 = vsyncadd %s176, %s181
          %s183 = smul.addr %s17, 128
          %s184 = scalar_lea.hbm %s0, %s183
          %s186 = sshll.u32 %s179, 4
          %s187 = int_to_ptr.vmem [resolvable:$true] %s186
          %189 = dma.hbm_to_vmem [thread:$0]  %s184, 128, %s187, %s176
        $region28: #{tpu_custom_call.1} parent=23 // pred_fallthru
          _
      $region24: #{tpu_custom_call.1} parent=5 // pred_fallthru
        _
      %p190 = scmp.le.s32.totalorder 1, %s17
      %p191 = scmp.lt.s32.totalorder %s17, 9
      %p192 = pnand %p190, %p191
      %p193 = pneg %p192
      // Predicated region
      $region29: #{tpu_custom_call.1} parent=5 // pred_check
        _
      $region30: #{tpu_custom_call.1} parent=5 // pred_check_branch
        %195 = sbr.rel (%p192) target = $region32
      $region31: #{tpu_custom_call.1} parent=5 // pred_region
        %s196 = ssub.s32 %s17, 1
        %s197 = sand.u32 %s30, 1
        %s198 = scalar_lea.sflag [#allocation5], %s197
        %s199 = sand.u32 %s30, 1
        %s200 = smul.addr %s199, 8
        %s201 = scalar_lea.vmem [#allocation4], %s200
        // Predicated region
        $region33: #{tpu_custom_call.1} parent=31 // pred_check
          %p202 = pneg %p43
        $region34: #{tpu_custom_call.1} parent=31 // pred_check_branch
          %204 = sbr.rel (%p202) target = $region36
        $region35: #{tpu_custom_call.1} parent=31 // pred_region
          %205 = dma.done %s198, 128
        $region36: #{tpu_custom_call.1} parent=31 // pred_fallthru
          _
        // Predicated region
        $region37: #{tpu_custom_call.1} parent=31 // pred_check
          %p206 = pneg %p64
        $region38: #{tpu_custom_call.1} parent=31 // pred_check_branch
          %208 = sbr.rel (%p206) target = $region40
        $region39: #{tpu_custom_call.1} parent=31 // pred_region
          %209 = dma.done [#allocation8], 256
        $region40: #{tpu_custom_call.1} parent=31 // pred_fallthru
          _
        // Predicated region
        $region41: #{tpu_custom_call.1} parent=31 // pred_check
          %p210 = pneg %p85
        $region42: #{tpu_custom_call.1} parent=31 // pred_check_branch
          %212 = sbr.rel (%p210) target = $region44
        $region43: #{tpu_custom_call.1} parent=31 // pred_region
          %213 = dma.done [#allocation8], 896
        $region44: #{tpu_custom_call.1} parent=31 // pred_fallthru
          _
        %s214 = sand.u32 %s30, 1
        %s215 = scalar_lea.sflag [#allocation5], %s214
        %s216 = sand.u32 %s30, 1
        %s217 = smul.addr %s216, 8
        %s218 = scalar_lea.vmem [#allocation4], %s217
        %p219 = pneg %p43
        %p220 = pneg %p40
        %p221 = pneg %p64
        %p222 = pneg %p61
        %p223 = pneg %p85
        %p224 = pneg %p82
        %p225 = pneg %p106
        %p226 = pneg %p103
        %p227 = pneg %p127
        %p228 = pneg %p124
        %p229 = scmp.eq.s32.totalorder %s22, 0
        // Predicated region
        $region45: #{tpu_custom_call.1} parent=31 // pred_check
          %p230 = pneg %p229
        $region46: #{tpu_custom_call.1} parent=31 // pred_check_branch
          %232 = sbr.rel (%p230) target = $region48
        $region47: #{tpu_custom_call.1} parent=31 // pred_region
          %v233 = vld [vmem:[#allocation7] sm:$0xff]
          %vm234 = vcmask 261120
          %235 = vst.msk [vmem:[#allocation2] sm:$0xff] %vm234, %v233
          %s236 = scalar_lea.vmem [#allocation7], 8
          %v237 = vld [vmem:[%s236] sm:$0xff]
          %238 = vst.msk [vmem:[#allocation3] sm:$0xff] %vm234, %v237
          %239 = vst [vmem:[#allocation10] sm:$0xff] 0.0
        $region48: #{tpu_custom_call.1} parent=31 // pred_fallthru
          _
        %v240 = vld [vmem:[%s201] sm:$0xff]
        %v241 = vld [vmem:[#allocation2] sm:$0xff]
        %243 = vrot.lane.b32.xlu0 %v241, 16
        %v244 = vpop.permute.xlu0 %243
        %vm246 = vcmask 130048
        %v247 = vsel %vm246, %v240, %v244
        %v248 = vld [vmem:[#allocation9] sm:$0xff]
        %v249 = vld [vmem:[#allocation9 + $0x8] sm:$0xff]
        %v250 = vld [vmem:[#allocation9 + $0x10] sm:$0xff]
        %v251 = vld [vmem:[#allocation9 + $0x18] sm:$0xff]
        %v252 = vld [vmem:[#allocation9 + $0x20] sm:$0xff]
        %v253 = vld [vmem:[#allocation9 + $0x28] sm:$0xff]
        %v254 = vld [vmem:[#allocation9 + $0x30] sm:$0x1]
        %v255 = vlaneseq
        %v256 = vshrl.u32 %v255, 7
        %v257 = vsub.s32 0, %v256
        %v258 = vrot.slane %v254, %v257
        %vm259 = vcmask 392192
        %v261 = vsel %vm259, %v247, 0
        %263 = vmatprep.subr.mxu0 0.0
        %264 = vmatpush1.msra.mxu0 %v248
        %265 = vmatprep.subr.mxu0 0.0
        %266 = vmatpush1.msra.mxu0 %v249
        %267 = vmatprep.subr.mxu0 0.0
        %268 = vmatpush1.msra.mxu0 %v250
        %269 = vmatprep.subr.mxu0 0.0
        %270 = vmatpush1.msra.mxu0 %v251
        %271 = vmatprep.subr.mxu0 0.0
        %272 = vmatpush1.msra.mxu0 %v252
        %273 = vmatprep.subr.mxu0 0.0
        %274 = vmatpush1.msra.mxu0 %v253
        %275 = vmatprep.subr.mxu0 0.0
        %276 = vmatpush1.msra.mxu0 0.0
        %277 = vmatprep.subr.mxu0 0.0
        %278 = vmatpush1.msra.mxu0 0.0
        %279 = vmatprep.subr.mxu0 0.0
        %280 = vmatpush1.msra.mxu0 0.0
        %281 = vmatprep.subr.mxu0 0.0
        %282 = vmatpush1.msra.mxu0 0.0
        %283 = vmatprep.subr.mxu0 0.0
        %284 = vmatpush1.msra.mxu0 0.0
        %285 = vmatprep.subr.mxu0 0.0
        %286 = vmatpush1.msra.mxu0 0.0
        %287 = vmatprep.subr.mxu0 0.0
        %288 = vmatpush1.msra.mxu0 0.0
        %289 = vmatprep.subr.mxu0 0.0
        %290 = vmatpush1.msra.mxu0 0.0
        %291 = vmatprep.subr.mxu0 0.0
        %292 = vmatpush1.msra.mxu0 0.0
        %293 = vmatprep.subr.mxu0 0.0
        %294 = vmatpush1.msra.mxu0 0.0
        %295 = vmatprep.subr.mxu0 0.0
        %296 = vmatpush1.msra.mxu0 0.0
        %297 = vmatprep.subr.mxu0 0.0
        %298 = vmatpush1.msra.mxu0 0.0
        %299 = vmatprep.subr.mxu0 0.0
        %300 = vmatpush1.msra.mxu0 0.0
        %301 = vmatprep.subr.mxu0 0.0
        %302 = vmatpush1.msra.mxu0 0.0
        %303 = vmatprep.subr.mxu0 0.0
        %304 = vmatpush1.msra.mxu0 0.0
        %305 = vmatprep.subr.mxu0 0.0
        %306 = vmatpush1.msra.mxu0 0.0
        %307 = vmatprep.subr.mxu0 0.0
        %308 = vmatpush1.msra.mxu0 0.0
        %309 = vmatprep.subr.mxu0 0.0
        %310 = vmatpush1.msra.mxu0 0.0
        %311 = vmatprep.subr.mxu0 0.0
        %312 = vmatpush1.msra.mxu0 0.0
        %313 = vmatprep.subr.mxu0 0.0
        %314 = vmatpush1.msra.mxu0 0.0
        %315 = vmatprep.subr.mxu0 0.0
        %316 = vmatpush1.msra.mxu0 0.0
        %317 = vmatprep.subr.mxu0 0.0
        %318 = vmatpush1.msra.mxu0 0.0
        %319 = vmatprep.subr.mxu0 0.0
        %320 = vmatpush1.msra.mxu0 0.0
        %321 = vmatprep.subr.mxu0 0.0
        %322 = vmatpush1.msra.mxu0 0.0
        %323 = vmatprep.subr.mxu0 0.0
        %324 = vmatpush1.msra.mxu0 0.0
        %325 = vmatprep.subr.mxu0 0.0
        %326 = vmatpush1.msra.mxu0 0.0
        %327 = vmatprep.mubr.f32.mxu0 0.0
        %328 = vmatmul.mubr.f32.gmra.mrb[0].mxu0 %v261
        %v329 = vpop.f32.mrb[0].mxu0
        %v330 = vadd.f32 %v258, %v329
        %v331 = vpop.f32.mrb[0].mxu0
        %332 = vdwg.mxu0
        %v333 = vxor.u32 %v330, 2147483648
        %v334 = vmul.f32 %v333, 1.442695
        %v335 = vpow.pop %v334
        %v336 = vadd.f32 %v335, 1.0
        %v337 = vrcp.pop %v336
        %v338 = vmul.f32 1.0, %v337
        %v339 = vtanh.pop %v330
        %v340 = vld [vmem:[#allocation3] sm:$0xff]
        %342 = vrot.lane.b32.xlu0 %v340, 32
        %v343 = vpop.permute.xlu0 %342
        %v345 = vmul.f32 %v338, %v343
        %347 = vrot.lane.b32.xlu0 %v339, 64
        %v348 = vpop.permute.xlu0 %347
        %v350 = vmul.f32 %v338, %v348
        %352 = vrot.lane.b32.xlu0 %v350, 32
        %v353 = vpop.permute.xlu0 %352
        %v355 = vadd.f32 %v345, %v353
        %v356 = vtanh.pop %v355
        %358 = vrot.lane.b32.xlu0 %v356, 64
        %v359 = vpop.permute.xlu0 %358
        %v361 = vmul.f32 %v338, %v359
        %363 = vrot.lane.b32.xlu0 %v361, 32
        %v364 = vpop.permute.xlu0 %363
        %vm366 = vcmask 261120
        %367 = vst.msk [vmem:[#allocation2] sm:$0xff] %vm366, %v364
        %369 = vrot.lane.b32.xlu0 %v355, 96
        %v370 = vpop.permute.xlu0 %369
        %372 = vst.msk [vmem:[#allocation3] sm:$0xff] %vm366, %v370
        %v373 = vxor.u32 %v361, 2147483648
        %v374 = vmul.f32 %v373, 1.442695
        %v375 = vpow.pop %v374
        %v376 = vadd.f32 %v375, 1.0
        %v377 = vrcp.pop %v376
        %v378 = vmul.f32 1.0, %v377
        %v379 = vld [vmem:[#allocation9 + $0x31] sm:$0x1]
        %v380 = vld [vmem:[#allocation9 + $0x32] sm:$0x1]
        %v381 = vlaneseq
        %v382 = vshrl.u32 %v381, 7
        %v383 = vsub.s32 0, %v382
        %v384 = vrot.slane %v379, %v383
        %386 = vrot.lane.b32.xlu0 %v384, 96
        %v387 = vpop.permute.xlu0 %386
        %v389 = vmul.f32 %v378, %v387
        %391 = vrot.lane.b32.xlu0 %v389, 32
        %v392 = vpop.permute.xlu0 %391
        %v394 = vsel %vm366, %v392, 0.0
        %395 = vadd.xlane.f32.xlu0 %v394
        %v396 = vpop.xlane.xlu0 %395
        %v397 = vlaneseq
        %v398 = vshrl.u32 %v397, 7
        %v399 = vsub.s32 0, %v398
        %v400 = vrot.slane %v380, %v399
        %v401 = vadd.f32 %v396, %v400
        %v402 = vlaneseq
        %v403 = vand.u32 %v402, 127
        %v404 = vstv %s22
        %vm405 = vcmp.eq.s32.totalorder %v403, %v404
        %v406 = vld [vmem:[#allocation10] sm:$0xff]
        %408 = vset.pattern.permute.xlu0 0
        %409 = vperm.xlu0 %408, %v401
        %v410 = vpop.permute.xlu0 %409
        %v412 = vsel %vm405, %v410, %v406
        %413 = vst [vmem:[#allocation10] sm:$0xff] %v412
        %p414 = scmp.eq.s32.totalorder %s22, 7
        // Predicated region
        $region49: #{tpu_custom_call.1} parent=31 // pred_check
          %p415 = pneg %p414
        $region50: #{tpu_custom_call.1} parent=31 // pred_check_branch
          %417 = sbr.rel (%p415) target = $region52
        $region51: #{tpu_custom_call.1} parent=31 // pred_region
          %v418 = vld [vmem:[#allocation2] sm:$0xff]
          %419 = vst.msk [vmem:[#allocation11] sm:$0xff] %vm366, %v418
          %v420 = vld [vmem:[#allocation3] sm:$0xff]
          %s421 = scalar_lea.vmem [#allocation11], 8
          %422 = vst.msk [vmem:[%s421] sm:$0xff] %vm366, %v420
        $region52: #{tpu_custom_call.1} parent=31 // pred_fallthru
          _
        // Predicated region
        $region53: #{tpu_custom_call.1} parent=31 // pred_check
          %p423 = pneg %p103
        $region54: #{tpu_custom_call.1} parent=31 // pred_check_branch
          %425 = sbr.rel (%p423) target = $region56
        $region55: #{tpu_custom_call.1} parent=31 // pred_region
          %s427 = ssub.s32 128, 128
          %428 = vsyncadd [#allocation6], %s427
          %s430 = sshll.u32 [#allocation10], 4
          %s431 = int_to_ptr.vmem [resolvable:$true] %s430
          %433 = dma.vmem_to_hbm [thread:$0]  %s431, 128, %s3, [#allocation6]
        $region56: #{tpu_custom_call.1} parent=31 // pred_fallthru
          _
        // Predicated region
        $region57: #{tpu_custom_call.1} parent=31 // pred_check
          %p434 = pneg %p124
        $region58: #{tpu_custom_call.1} parent=31 // pred_check_branch
          %436 = sbr.rel (%p434) target = $region60
        $region59: #{tpu_custom_call.1} parent=31 // pred_region
          %s438 = ssub.s32 256, 256
          %439 = vsyncadd [#allocation12], %s438
          %s440 = sshll.u32 [#allocation11], 4
          %s441 = int_to_ptr.vmem [resolvable:$true] %s440
          %446 = dma.vmem_to_hbm [thread:$0]  %s441, 256, %s4, [#allocation12], 128, 128, 8
        $region60: #{tpu_custom_call.1} parent=31 // pred_fallthru
          _
        // Predicated region
        $region61: #{tpu_custom_call.1} parent=31 // pred_check
          %p447 = pneg %p103
        $region62: #{tpu_custom_call.1} parent=31 // pred_check_branch
          %449 = sbr.rel (%p447) target = $region64
        $region63: #{tpu_custom_call.1} parent=31 // pred_region
          %450 = dma.done [#allocation6], 128
        $region64: #{tpu_custom_call.1} parent=31 // pred_fallthru
          _
        // Predicated region
        $region65: #{tpu_custom_call.1} parent=31 // pred_check
          %p451 = pneg %p124
        $region66: #{tpu_custom_call.1} parent=31 // pred_check_branch
          %453 = sbr.rel (%p451) target = $region68
        $region67: #{tpu_custom_call.1} parent=31 // pred_region
          %454 = dma.done [#allocation12], 256
        $region68: #{tpu_custom_call.1} parent=31 // pred_fallthru
          _
      $region32: #{tpu_custom_call.1} parent=5 // pred_fallthru
        _
      %p455 = scmp.le.s32.totalorder 2, %s17
      // Predicated region
      $region69: #{tpu_custom_call.1} parent=5 // pred_check
        %p456 = pneg %p455
      $region70: #{tpu_custom_call.1} parent=5 // pred_check_branch
        %458 = sbr.rel (%p456) target = $region72
      $region71: #{tpu_custom_call.1} parent=5 // pred_region
        %s459 = ssub.s32 %s17, 2
      $region72: #{tpu_custom_call.1} parent=5 // pred_fallthru
        _
    $region6: #{tpu_custom_call.1} parent=1 // loop_footer
      %s21 = sadd.s32 1, %s17
    $region7: #{tpu_custom_call.1} parent=1 // loop_footer_branch
      %16 = sbr.rel target = $region3
    $region8: #{tpu_custom_call.1} parent=1 // loop_exit
      _
    %460 = vsyncpa [#allocation5], 1
    %s461 = scalar_lea.sflag [#allocation5], 1
    %462 = vsyncpa %s461, 1
    %463 = vsyncpa [#allocation8], 1
    %464 = vsyncpa [#allocation6], 1
    %s465 = scalar_lea.sflag [#allocation6], 1
    %466 = vsyncpa %s465, 1
    %467 = vsyncpa [#allocation12], 1

</llo_original>
